<compile_context>
chip_gen: v7x
topology: tpu7x:2x2x1
jax: 0.10.0
libtpu: 0.0.40
codegen_flags: <defaults>
</compile_context>

<pallas_src>
import jax
import jax.numpy as jnp
from jax import lax
from jax.experimental import pallas as pl
from jax.experimental.pallas import tpu as pltpu


def _round_up(x: int, m: int) -> int:
    return ((x + m - 1) // m) * m


def _min_identity(dtype):
    """Identity element for a running min (Python scalar)."""
    dtype = jnp.dtype(dtype)
    if jnp.issubdtype(dtype, jnp.floating):
        return float("inf")
    if jnp.issubdtype(dtype, jnp.integer):
        return int(jnp.iinfo(dtype).max)
    raise TypeError(f"unsupported dtype for min readout: {dtype}")


def _vmem_capacity_bytes() -> int:
    """Per-core VMEM capacity; conservative (v7x) default if query fails."""
    try:
        return int(pltpu.get_tpu_info().vmem_capacity_bytes)
    except Exception:
        return 64 * 2**20


def _make_min_kernel(n_total: int, block_n: int, ident):
    """Kernel over one (tb, tn, td) input tile; out_ref is the resident
    (tb, td) running-min accumulator across the trailing 'arbitrary' axis."""
    needs_mask = (n_total % block_n) != 0

    def kernel(seq_ref, out_ref):
        k = pl.program_id(2)

        @pl.when(k == 0)
        def _init():
            out_ref[...] = jnp.full(out_ref.shape, ident, out_ref.dtype)

        x = seq_ref[...]

        if needs_mask:
            last = pl.num_programs(2) - 1

            @pl.when(k != last)
            def _full_tile():
                out_ref[...] = jnp.minimum(out_ref[...], jnp.min(x, axis=1))

            @pl.when(k == last)
            def _remainder_tile():
                # Rows >= rem in this tile are out of bounds (garbage reads);
                # neutralize them with the min identity before reducing.
                # A few VPU ops, hidden under the DMA stream.
                rem = n_total - k * block_n
                row = lax.broadcasted_iota(jnp.int32, x.shape, 1)
                xm = jnp.where(row < rem, x, jnp.full_like(x, ident))
                out_ref[...] = jnp.minimum(out_ref[...], jnp.min(xm, axis=1))
        else:
            out_ref[...] = jnp.minimum(out_ref[...], jnp.min(x, axis=1))

    return kernel


def min_readout(seq: jax.Array, *, block_n=None, block_d=None,
                force_pallas: bool = False) -> jax.Array:
    """Pallas TPU implementation of MinReadout.forward: min over axis 1.

    Args:
      seq: (B, N, D) array.
      block_n, block_d: optional tile-size overrides (testing / tuning).
      force_pallas: bypass the small-size fallback (testing).
    Returns:
      (B, D) array == torch.min(seq, 1).values.
    """
    B, N, D = seq.shape
    dtype = seq.dtype
    itemsize = jnp.dtype(dtype).itemsize

    try:
        ident = _min_identity(dtype)
    except TypeError:
        return jnp.min(seq, axis=1)

    total_bytes = B * N * D * itemsize
    # Fallback: lane-sparse D forces masked vst.msk stores; below ~0.5 MiB the
    # per-step (~0.35 us) + launch overhead loses to XLA's fused reduce.
    if D % 128 != 0 or (total_bytes < 512 * 1024 and not force_pallas):
        return jnp.min(seq, axis=1)

    # ---- tile selection -----------------------------------------------------
    sub = max(8, 32 // itemsize)          # sublane granularity (f32:8, bf16:16)
    if N < sub:
        return jnp.min(seq, axis=1)

    tb = min(B, sub)                      # B is parallel; small sublane-aligned
    b_grid = pl.cdiv(B, tb)               # last B block may hang past B: OK

    # Per-step streaming tile target ~8 MiB (>=512-wide tiles hit 85%+ of HBM
    # roofline), kept under the per-core VMEM budget with double buffering.
    vmem_cap = _vmem_capacity_bytes()
    budget = min(vmem_cap // 2, 32 * 2**20)
    per_tile_cap = min(8 * 2**20, budget // 3)

    # D (contiguous minor) tile: prefer full D -> one contiguous DMA per
    # (tn, D) slab; otherwise the largest 128-multiple divisor that fits.
    if block_d is not None:
        assert block_d % 128 == 0 and D % block_d == 0
        td = block_d
    else:
        max_td = max(128, per_tile_cap // (tb * sub * itemsize))
        if D <= max_td:
            td = D
        else:
            td = 128
            cand = 256
            while cand <= max_td:
                if D % cand == 0:
                    td = cand
                cand += 128
        # v7x megacore: keep >= 2 blocks on the parallel axes so both
        # TensorCores get work (no-op on single-TC v5e/v6e).
        if b_grid * (D // td) < 2 and D % 256 == 0:
            td = D // 2

    # N (reduction) tile: as large as fits the per-step cap; no HBM padding —
    # the remainder tile is masked inside the kernel.
    if block_n is not None:
        tn = max(sub, _round_up(int(block_n), sub))
    else:
        tn = max(sub, (per_tile_cap // (tb * td * itemsize)) // sub * sub)
    tn = min(tn, _round_up(N, sub))

    grid = (b_grid, D // td, pl.cdiv(N, tn))   # reduction axis last

    in_tile_bytes = tb * tn * td * itemsize
    out_tile_bytes = tb * td * itemsize
    vmem_limit = int(min(vmem_cap,
                         2 * in_tile_bytes + 2 * out_tile_bytes + (2 << 20)))

    cost = pl.CostEstimate(
        flops=B * N * D,
        transcendentals=0,
        bytes_accessed=B * N * D * itemsize + B * D * itemsize)

    kernel = _make_min_kernel(N, tn, ident)

    return pl.pallas_call(
        kernel,
        out_shape=jax.ShapeDtypeStruct((B, D), dtype),
        grid=grid,
        in_specs=[pl.BlockSpec((tb, tn, td), lambda i, j, k: (i, k, j))],
        # Same (i, j) block for every k -> output tile stays resident in VMEM
        # across the reduction axis (accumulator pattern).
        out_specs=pl.BlockSpec((tb, td), lambda i, j, k: (i, j)),
        compiler_params=pltpu.CompilerParams(
            dimension_semantics=("parallel", "parallel", "arbitrary"),
            vmem_limit_bytes=vmem_limit,
        ),
        cost_estimate=cost,
    )(seq)


if __name__ == "__main__":
    key = jax.random.PRNGKey(0)
    k1, k2, k3 = jax.random.split(key, 3)

    # 1) Small lane-dense shape, forced onto the Pallas path with a small N
    #    tile so the resident accumulator runs across several grid steps and
    #    the in-kernel remainder mask (50 % 16 != 0) is exercised.
    B, N, D = 4, 50, 256
    seq = jax.random.normal(k1, (B, N, D), dtype=jnp.float32)
    ref = jnp.min(seq, axis=1)

    out = jax.block_until_ready(min_readout(seq, block_n=16, force_pallas=True))
    assert out.shape == (B, D), out.shape
    assert bool(jnp.array_equal(out, ref)), "mismatch (multi-step pallas path)"

    # 2) Same shape with automatic tiling (single N step, masked remainder).
    out2 = jax.block_until_ready(min_readout(seq, force_pallas=True))
    assert bool(jnp.array_equal(out2, ref)), "mismatch (auto-tiled pallas path)"

    # 3) Shape above the size threshold -> natural Pallas path; B=10 is not a
    #    sublane multiple (tb=8 with an over-hanging last B block) and
    #    N=130 exercises the remainder mask.
    B2, N2, D2 = 10, 130, 512
    seq2 = jax.random.normal(k2, (B2, N2, D2), dtype=jnp.float32)
    out3 = jax.block_until_ready(min_readout(seq2))
    assert bool(jnp.array_equal(out3, jnp.min(seq2, axis=1))), \
        "mismatch (natural pallas path)"

    # 4) Tiny / lane-sparse shape (like the original D=32 demo) -> jnp.min
    #    fast path.
    small = jax.random.normal(k3, (2, 8, 32), dtype=jnp.float32)
    out4 = jax.block_until_ready(min_readout(small))
    assert bool(jnp.array_equal(out4, jnp.min(small, axis=1))), \
        "mismatch (fallback path)"

    print("KERNEL_OK")
</pallas_src>

<mosaic_0001>
module attributes {stable_mosaic.version = 11 : i64} {
  func.func @kernel(%arg0: i32, %arg1: i32, %arg2: i32, %arg3: memref<4x16x128xf32, #tpu.memory_space<vmem>>, %arg4: memref<4x128xf32, #tpu.memory_space<vmem>>) attributes {dimension_semantics = [#tpu.dimension_semantics<parallel>, #tpu.dimension_semantics<parallel>, #tpu.dimension_semantics<arbitrary>], iteration_bounds = array<i64: 1, 2, 4>, scalar_prefetch = 0 : i64, scratch_operands = 0 : i64, tpu.core_type = #tpu.core_type<tc>, window_params = [{transform_indices = @transform_0, window_bounds = array<i64: 4, 16, 128>}, {transform_indices = @transform_1, window_bounds = array<i64: 4, 128>}]} {
    %c0_i32 = arith.constant 0 : i32
    %0 = arith.cmpi eq, %arg2, %c0_i32 : i32
    %1 = arith.extui %0 : i1 to i32
    %c0_i32_0 = arith.constant 0 : i32
    %2 = arith.cmpi ne, %1, %c0_i32_0 : i32
    scf.if %2 {
      %cst = arith.constant 0x7F800000 : f32
      %10 = vector.broadcast %cst : f32 to vector<4x128xf32>
      %c0_6 = arith.constant 0 : index
      %c0_7 = arith.constant 0 : index
      %11 = vector.load %arg4[%c0_6, %c0_7] : memref<4x128xf32, #tpu.memory_space<vmem>>, vector<4x128xf32>
      tpu.vector_store %arg4[%c0_6, %c0_7], %10 {strides = array<i32>} : memref<4x128xf32, #tpu.memory_space<vmem>>, vector<4x128xf32>,
    } else {
    }
    %c0 = arith.constant 0 : index
    %c0_1 = arith.constant 0 : index
    %c0_2 = arith.constant 0 : index
    %3 = vector.load %arg3[%c0, %c0_1, %c0_2] : memref<4x16x128xf32, #tpu.memory_space<vmem>>, vector<4x16x128xf32>
    %c3_i32 = arith.constant 3 : i32
    %4 = arith.cmpi ne, %arg2, %c3_i32 : i32
    %5 = arith.extui %4 : i1 to i32
    %c0_i32_3 = arith.constant 0 : i32
    %6 = arith.cmpi ne, %5, %c0_i32_3 : i32
    scf.if %6 {
      %c0_6 = arith.constant 0 : index
      %c0_7 = arith.constant 0 : index
      %10 = vector.load %arg4[%c0_6, %c0_7] : memref<4x128xf32, #tpu.memory_space<vmem>>, vector<4x128xf32>
      %cst = arith.constant dense<0x7F800000> : vector<4x128xf32>
      %11 = vector.multi_reduction <minimumf>, %3, %cst [1] : vector<4x16x128xf32> to vector<4x128xf32>
      %12 = arith.minimumf %10, %11 : vector<4x128xf32>
      %c0_8 = arith.constant 0 : index
      %c0_9 = arith.constant 0 : index
      %13 = vector.load %arg4[%c0_8, %c0_9] : memref<4x128xf32, #tpu.memory_space<vmem>>, vector<4x128xf32>
      tpu.vector_store %arg4[%c0_8, %c0_9], %12 {strides = array<i32>} : memref<4x128xf32, #tpu.memory_space<vmem>>, vector<4x128xf32>,
    } else {
    }
    %c3_i32_4 = arith.constant 3 : i32
    %7 = arith.cmpi eq, %arg2, %c3_i32_4 : i32
    %8 = arith.extui %7 : i1 to i32
    %c0_i32_5 = arith.constant 0 : i32
    %9 = arith.cmpi ne, %8, %c0_i32_5 : i32
    scf.if %9 {
      %c16_i32 = arith.constant 16 : i32
      %10 = arith.muli %arg2, %c16_i32 : i32
      %c50_i32 = arith.constant 50 : i32
      %11 = arith.subi %c50_i32, %10 : i32
      %12 = tpu.iota {dimensions = array<i32: 1>} : vector<4x16x128xi32>
      %13 = vector.broadcast %11 : i32 to vector<4x16x128xi32>
      %14 = arith.cmpi slt, %12, %13 : vector<4x16x128xi32>
      %cst = arith.constant 0x7F800000 : f32
      %15 = vector.broadcast %cst : f32 to vector<4x16x128xf32>
      %16 = arith.select %14, %3, %15 : vector<4x16x128xi1>, vector<4x16x128xf32>
      %c0_6 = arith.constant 0 : index
      %c0_7 = arith.constant 0 : index
      %17 = vector.load %arg4[%c0_6, %c0_7] : memref<4x128xf32, #tpu.memory_space<vmem>>, vector<4x128xf32>
      %cst_8 = arith.constant dense<0x7F800000> : vector<4x128xf32>
      %18 = vector.multi_reduction <minimumf>, %16, %cst_8 [1] : vector<4x16x128xf32> to vector<4x128xf32>
      %19 = arith.minimumf %17, %18 : vector<4x128xf32>
      %c0_9 = arith.constant 0 : index
      %c0_10 = arith.constant 0 : index
      %20 = vector.load %arg4[%c0_9, %c0_10] : memref<4x128xf32, #tpu.memory_space<vmem>>, vector<4x128xf32>
      tpu.vector_store %arg4[%c0_9, %c0_10], %19 {strides = array<i32>} : memref<4x128xf32, #tpu.memory_space<vmem>>, vector<4x128xf32>,
    } else {
    }
    return
  }
  func.func @transform_0(%arg0: i32, %arg1: i32, %arg2: i32) -> (i32, i32, i32) {
    %c0_i32 = arith.constant 0 : i32
    return %arg0, %arg2, %arg1 : i32, i32, i32
  }
  func.func @transform_1(%arg0: i32, %arg1: i32, %arg2: i32) -> (i32, i32) {
    %c0_i32 = arith.constant 0 : i32
    return %arg0, %arg1 : i32, i32
  }
}

</mosaic_0001>

<llo_original>
// kernel: tpu_custom_call.1
$region0: #{tpu_custom_call.1}
  #allocation0 [shape = 'u32[]', space=smem, size = 0x4, offset = 0x4, fixed_abs, tag = 'smem constant byte address 0x4 - core index']
  #allocation1 [shape = 'u32[144,128]{1,0:T(1,128)}', space=vmem, size = 0x12000, scoped, tag = 'internal scratch']
  %s0 = inlined_call_operand.vmem [shape: f32[4,50,256], index: 0, kind: input, shape index: {}]
  %s1 = inlined_call_operand.hbm [shape: f32[4,256], index: 1, kind: output, shape index: {}]
  %s2 = sld [smem:[#allocation0]]
  $region101: #{tpu_custom_call.1} parent=0
    _
  %s4 = ssub.s32 1, %s2
  %s5 = scalar_select 0, %s4, %s2
  $region1: #{tpu_custom_call.1} parent=0
    #allocation2 [shape = 'u8[65536]{0}', space=vmem, size = 0x10000, scoped, tag = 'input window, operand 0']
    #allocation3 [shape = 'u8[4096]{0}', space=vmem, size = 0x1000, scoped, tag = 'output window, operand 0']
    #allocation4 [shape = 's32[2]{0}', space=sflag, size = 0x8, scoped, tag = 'scoped memory for tpu_custom_call.1']
    %6 = vsyncpa [#allocation4], 0
    %s7 = scalar_lea.sflag [#allocation4], 1
    %8 = vsyncpa %s7, 0
    loop: start=0, step=1, limit=10
    $region2: #{tpu_custom_call.1} parent=1 // loop_pre_header
      _
    $region3: #{tpu_custom_call.1} parent=1 // loop_header
      %s10 = sphi 0, %s14
      %p11 = scmp.ge.s32.totalorder %s10, 10
      %s17 = sphi 0, %s36
      %s18 = sphi 0, %s32
      %s19 = sphi 0, %s28
      %s20 = sphi 0, %s17
      %s21 = sphi 0, %s18
      %s22 = sphi 0, %s19
      %s23 = sphi 0, %s20
      %s24 = sphi 0, %s21
      %s25 = sphi 0, %s22
      %s43 = sphi 0, %s45
      %s46 = sphi 0, %s43
      %s47 = sphi 0, %s46
      %s63 = sphi 0, %s47
      %s71 = sphi 0, %s73
      %s74 = sphi 0, %s71
      %s75 = sphi 0, %s74
      %s91 = sphi 0, %s75
    $region4: #{tpu_custom_call.1} parent=1 // loop_header_branch
      %13 = sbr.rel (%p11) target = $region8
    $region5: #{tpu_custom_call.1} parent=1 // loop_body
      %s15 = ssub.s32 %s10, 1
      %s16 = ssub.s32 %s10, 2
      %s26 = sadd.s32 1, %s19
      %p27 = scmp.ge.s32.totalorder %s26, 4
      %s28 = scalar_select %p27, 0, %s26
      %s29 = sadd.s32 1, %s18
      %s30 = scalar_select %p27, %s29, %s18
      %p31 = scmp.ge.s32.totalorder %s30, 2
      %s32 = scalar_select %p31, 0, %s30
      %s33 = sadd.s32 1, %s17
      %s34 = scalar_select %p31, %s33, %s17
      %p35 = scmp.ge.s32.totalorder %s34, 1
      %s36 = scalar_select %p35, 0, %s34
      %s37 = ssub.s32 %s17, %s36
      %s38 = ssub.s32 %s19, %s28
      %s39 = sor.u32 %s37, %s38
      %s40 = ssub.s32 %s18, %s32
      %s41 = sor.u32 %s39, %s40
      %p42 = scmp.eq.s32.totalorder %s41, 0
      %s44 = sadd.s32 %s43, 1
      %s45 = scalar_select %p42, %s43, %s44
      %p48 = pneg %p42
      %p49 = scmp.eq.s32.totalorder %s10, 7
      %p50 = por %p48, %p49
      %p51 = scmp.ne.s32.totalorder %s43, %s46
      %p52 = scmp.eq.s32.totalorder %s10, 0
      %p53 = por %p51, %p52
      %p54 = scmp.ne.s32.totalorder %s43, %s46
      %p55 = scmp.eq.s32.totalorder %s15, 7
      %p56 = por %p54, %p55
      %p57 = scmp.ne.s32.totalorder %s46, %s47
      %p58 = scmp.eq.s32.totalorder %s15, 0
      %p59 = por %p57, %p58
      %p60 = scmp.ne.s32.totalorder %s46, %s47
      %p61 = scmp.eq.s32.totalorder %s16, 7
      %p62 = por %p60, %p61
      %p64 = scmp.ne.s32.totalorder %s47, %s63
      %p65 = scmp.eq.s32.totalorder %s16, 0
      %p66 = por %p64, %p65
      %s67 = ssub.s32 %s17, %s36
      %s68 = ssub.s32 %s18, %s32
      %s69 = sor.u32 %s67, %s68
      %p70 = scmp.eq.s32.totalorder %s69, 0
      %s72 = sadd.s32 %s71, 1
      %s73 = scalar_select %p70, %s71, %s72
      %p76 = pneg %p70
      %p77 = scmp.eq.s32.totalorder %s10, 7
      %p78 = por %p76, %p77
      %p79 = scmp.ne.s32.totalorder %s71, %s74
      %p80 = scmp.eq.s32.totalorder %s10, 0
      %p81 = por %p79, %p80
      %p82 = scmp.ne.s32.totalorder %s71, %s74
      %p83 = scmp.eq.s32.totalorder %s15, 7
      %p84 = por %p82, %p83
      %p85 = scmp.ne.s32.totalorder %s74, %s75
      %p86 = scmp.eq.s32.totalorder %s15, 0
      %p87 = por %p85, %p86
      %p88 = scmp.ne.s32.totalorder %s74, %s75
      %p89 = scmp.eq.s32.totalorder %s16, 7
      %p90 = por %p88, %p89
      %p92 = scmp.ne.s32.totalorder %s75, %s91
      %p93 = scmp.eq.s32.totalorder %s16, 0
      %p94 = por %p92, %p93
      %p95 = scmp.le.s32.totalorder 1, %s10
      %p96 = scmp.lt.s32.totalorder %s10, 9
      %p97 = pnand %p95, %p96
      %p98 = pneg %p97
      // Predicated region
      $region9: #{tpu_custom_call.1} parent=5 // pred_check
        _
      $region10: #{tpu_custom_call.1} parent=5 // pred_check_branch
        %100 = sbr.rel (%p97) target = $region12
      $region11: #{tpu_custom_call.1} parent=5 // pred_region
        %s101 = ssub.s32 %s10, 1
      $region12: #{tpu_custom_call.1} parent=5 // pred_fallthru
        _
      %p102 = scmp.lt.s32.totalorder %s10, 8
      // Predicated region
      $region13: #{tpu_custom_call.1} parent=5 // pred_check
        %p103 = pneg %p102
      $region14: #{tpu_custom_call.1} parent=5 // pred_check_branch
        %105 = sbr.rel (%p103) target = $region16
      $region15: #{tpu_custom_call.1} parent=5 // pred_region
        // Predicated region
        $region17: #{tpu_custom_call.1} parent=15 // pred_check
          %p106 = pneg %p53
        $region18: #{tpu_custom_call.1} parent=15 // pred_check_branch
          %108 = sbr.rel (%p106) target = $region20
        $region19: #{tpu_custom_call.1} parent=15 // pred_region
          %s109 = sand.u32 %s43, 1
          %s110 = sand.u32 %s43, 1
          %s111 = smul.addr %s110, 64
          %s112 = scalar_lea.vmem [#allocation2], %s111
          %s113 = smul.u32 4, %s17
          %s114 = smul.u32 2, %s19
          %s115 = ssub.s32 7, %s114
          %p116 = scmp.lt.s32.totalorder %s115, 2
          %s117 = scalar_select %p116, %s115, 2
          %s118 = smul.u32 512, %s117
          %p119 = scmp.ne.s32.totalorder 0, %s118
          %s120 = smul.addr %s114, 2
          %s121 = sadd.s32 %s18, %s120
          %s122 = smul.addr %s113, 14
          %s123 = sadd.s32 %s121, %s122
          %s124 = smul.addr %s123, 8
          %s125 = scalar_lea.vmem %s0, %s124
          // Predicated region
          $region21: #{tpu_custom_call.1} parent=19 // pred_check
            %p126 = pneg %p119
          $region22: #{tpu_custom_call.1} parent=19 // pred_check_branch
            %128 = sbr.rel (%p126) target = $region24
          $region23: #{tpu_custom_call.1} parent=19 // pred_region
            // Predicated region
            $region25: #{tpu_custom_call.1} parent=23 // pred_check
              _
            $region26: #{tpu_custom_call.1} parent=23 // pred_check_branch
              %130 = sbr.rel (0) target = $region28
            $region27: #{tpu_custom_call.1} parent=23 // pred_region
              // Predicated region
              $region47: #{tpu_custom_call.1} parent=27 // pred_check
                _
              $region48: #{tpu_custom_call.1} parent=27 // pred_check_branch
                %199 = sbr.rel (0) target = $region50
              $region49: #{tpu_custom_call.1} parent=27 // pred_region
                %s200 = sshrl.u32 %s117, 1
                // While loop
                $region51: #{tpu_custom_call.1} parent=49 // loop_pre_header
                  _
                $region52: #{tpu_custom_call.1} parent=49 // loop_header
                  %s202 = sphi 0, %s204
                  %p203 = scmp.ge.s32.totalorder %s202, %s200
                  %s207 = sphi 0, %s228
                  %s208 = sphi %s125, %s231
                  %s209 = sphi %s112, %s232
                $region53: #{tpu_custom_call.1} parent=49 // loop_header_branch
                  %206 = sbr.rel (%p203) target = $region57
                $region54: #{tpu_custom_call.1} parent=49 // loop_body
                  %v210 = vld [vmem:[%s208] sm:$0xff]
                  %211 = vst [vmem:[%s209] sm:$0xff] %v210
                  %v212 = vld [vmem:[%s208 + $0x10] sm:$0xff]
                  %213 = vst [vmem:[%s209 + $0x8] sm:$0xff] %v212
                  %v214 = vld [vmem:[%s208 + $0x70] sm:$0xff]
                  %215 = vst [vmem:[%s209 + $0x10] sm:$0xff] %v214
                  %v216 = vld [vmem:[%s208 + $0x80] sm:$0xff]
                  %217 = vst [vmem:[%s209 + $0x18] sm:$0xff] %v216
                  %v218 = vld [vmem:[%s208 + $0xe0] sm:$0xff]
                  %219 = vst [vmem:[%s209 + $0x20] sm:$0xff] %v218
                  %v220 = vld [vmem:[%s208 + $0xf0] sm:$0xff]
                  %221 = vst [vmem:[%s209 + $0x28] sm:$0xff] %v220
                  %v222 = vld [vmem:[%s208 + $0x150] sm:$0xff]
                  %223 = vst [vmem:[%s209 + $0x30] sm:$0xff] %v222
                  %v224 = vld [vmem:[%s208 + $0x160] sm:$0xff]
                  %225 = vst [vmem:[%s209 + $0x38] sm:$0xff] %v224
                  %s226 = sadd.s32 1, %s207
                  %p227 = scmp.ge.s32.totalorder %s226, %s200
                  %s228 = scalar_select %p227, 0, %s226
                  %s229 = smul.u32 %s228, 32
                  %s230 = smul.u32 %s228, 16
                  %s231 = scalar_lea.vmem %s125, %s229
                  %s232 = scalar_lea.vmem %s112, %s230 [#allocation2]
                $region55: #{tpu_custom_call.1} parent=49 // loop_footer
                  %s204 = sadd.s32 %s202, 1
                $region56: #{tpu_custom_call.1} parent=49 // loop_footer_branch
                  %201 = sbr.rel target = $region52
                $region57: #{tpu_custom_call.1} parent=49 // loop_exit
                  _
                %s233 = sshrl.u32 %s117, 1
                %s234 = sand.u32 %s117, 1
                %s235 = smul.u32 %s233, 2
                %s236 = smul.u32 16, %s235
                %s237 = scalar_lea.vmem %s125, %s236
                %s238 = smul.u32 8, %s235
                %s239 = scalar_lea.vmem %s112, %s238 [#allocation2]
                // While loop
                $region58: #{tpu_custom_call.1} parent=49 // loop_pre_header
                  _
                $region59: #{tpu_custom_call.1} parent=49 // loop_header
                  %s241 = sphi 0, %s243
                  %p242 = scmp.ge.s32.totalorder %s241, %s234
                  %s246 = sphi 0, %s259
                  %s247 = sphi %s237, %s262
                  %s248 = sphi %s239, %s263
                $region60: #{tpu_custom_call.1} parent=49 // loop_header_branch
                  %245 = sbr.rel (%p242) target = $region64
                $region61: #{tpu_custom_call.1} parent=49 // loop_body
                  %v249 = vld [vmem:[%s247] sm:$0xff]
                  %250 = vst [vmem:[%s248] sm:$0xff] %v249
                  %v251 = vld [vmem:[%s247 + $0x70] sm:$0xff]
                  %252 = vst [vmem:[%s248 + $0x10] sm:$0xff] %v251
                  %v253 = vld [vmem:[%s247 + $0xe0] sm:$0xff]
                  %254 = vst [vmem:[%s248 + $0x20] sm:$0xff] %v253
                  %v255 = vld [vmem:[%s247 + $0x150] sm:$0xff]
                  %256 = vst [vmem:[%s248 + $0x30] sm:$0xff] %v255
                  %s257 = sadd.s32 1, %s246
                  %p258 = scmp.ge.s32.totalorder %s257, %s234
                  %s259 = scalar_select %p258, 0, %s257
                  %s260 = smul.u32 %s259, 16
                  %s261 = smul.u32 %s259, 8
                  %s262 = scalar_lea.vmem %s237, %s260
                  %s263 = scalar_lea.vmem %s239, %s261 [#allocation2]
                $region62: #{tpu_custom_call.1} parent=49 // loop_footer
                  %s243 = sadd.s32 %s241, 1
                $region63: #{tpu_custom_call.1} parent=49 // loop_footer_branch
                  %240 = sbr.rel target = $region59
                $region64: #{tpu_custom_call.1} parent=49 // loop_exit
                  _
              $region50: #{tpu_custom_call.1} parent=27 // pred_fallthru
                _
              // Predicated region
              $region65: #{tpu_custom_call.1} parent=27 // pred_check
                _
              $region66: #{tpu_custom_call.1} parent=27 // pred_check_branch
                %265 = sbr.rel target = $region68
              $region67: #{tpu_custom_call.1} parent=27 // pred_region
                _
              $region68: #{tpu_custom_call.1} parent=27 // pred_fallthru
                _
            $region28: #{tpu_custom_call.1} parent=23 // pred_fallthru
              _
            // Predicated region
            $region29: #{tpu_custom_call.1} parent=23 // pred_check
              _
            $region30: #{tpu_custom_call.1} parent=23 // pred_check_branch
              %132 = sbr.rel target = $region32
            $region31: #{tpu_custom_call.1} parent=23 // pred_region
              %s134 = sshrl.u32 %s117, 1
              // While loop
              $region33: #{tpu_custom_call.1} parent=31 // loop_pre_header
                _
              $region34: #{tpu_custom_call.1} parent=31 // loop_header
                %s136 = sphi 0, %s138
                %p137 = scmp.ge.s32.totalorder %s136, %s134
                %s141 = sphi 0, %s162
                %s142 = sphi %s125, %s165
                %s143 = sphi %s112, %s166
              $region35: #{tpu_custom_call.1} parent=31 // loop_header_branch
                %140 = sbr.rel (%p137) target = $region39
              $region36: #{tpu_custom_call.1} parent=31 // loop_body
                %v144 = vld [vmem:[%s142] sm:$0xff]
                %145 = vst [vmem:[%s143] sm:$0xff] %v144
                %v146 = vld [vmem:[%s142 + $0x10] sm:$0xff]
                %147 = vst [vmem:[%s143 + $0x8] sm:$0xff] %v146
                %v148 = vld [vmem:[%s142 + $0x70] sm:$0xff]
                %149 = vst [vmem:[%s143 + $0x10] sm:$0xff] %v148
                %v150 = vld [vmem:[%s142 + $0x80] sm:$0xff]
                %151 = vst [vmem:[%s143 + $0x18] sm:$0xff] %v150
                %v152 = vld [vmem:[%s142 + $0xe0] sm:$0xff]
                %153 = vst [vmem:[%s143 + $0x20] sm:$0xff] %v152
                %v154 = vld [vmem:[%s142 + $0xf0] sm:$0xff]
                %155 = vst [vmem:[%s143 + $0x28] sm:$0xff] %v154
                %v156 = vld [vmem:[%s142 + $0x150] sm:$0xff]
                %157 = vst [vmem:[%s143 + $0x30] sm:$0xff] %v156
                %v158 = vld [vmem:[%s142 + $0x160] sm:$0xff]
                %159 = vst [vmem:[%s143 + $0x38] sm:$0xff] %v158
                %s160 = sadd.s32 1, %s141
                %p161 = scmp.ge.s32.totalorder %s160, %s134
                %s162 = scalar_select %p161, 0, %s160
                %s163 = smul.u32 %s162, 32
                %s164 = smul.u32 %s162, 16
                %s165 = scalar_lea.vmem %s125, %s163
                %s166 = scalar_lea.vmem %s112, %s164 [#allocation2]
              $region37: #{tpu_custom_call.1} parent=31 // loop_footer
                %s138 = sadd.s32 %s136, 1
              $region38: #{tpu_custom_call.1} parent=31 // loop_footer_branch
                %135 = sbr.rel target = $region34
              $region39: #{tpu_custom_call.1} parent=31 // loop_exit
                _
              %s167 = sshrl.u32 %s117, 1
              %s168 = sand.u32 %s117, 1
              %s169 = smul.u32 %s167, 2
              %s170 = smul.u32 16, %s169
              %s171 = scalar_lea.vmem %s125, %s170
              %s172 = smul.u32 8, %s169
              %s173 = scalar_lea.vmem %s112, %s172 [#allocation2]
              // While loop
              $region40: #{tpu_custom_call.1} parent=31 // loop_pre_header
                _
              $region41: #{tpu_custom_call.1} parent=31 // loop_header
                %s175 = sphi 0, %s177
                %p176 = scmp.ge.s32.totalorder %s175, %s168
                %s180 = sphi 0, %s193
                %s181 = sphi %s171, %s196
                %s182 = sphi %s173, %s197
              $region42: #{tpu_custom_call.1} parent=31 // loop_header_branch
                %179 = sbr.rel (%p176) target = $region46
              $region43: #{tpu_custom_call.1} parent=31 // loop_body
                %v183 = vld [vmem:[%s181] sm:$0xff]
                %184 = vst [vmem:[%s182] sm:$0xff] %v183
                %v185 = vld [vmem:[%s181 + $0x70] sm:$0xff]
                %186 = vst [vmem:[%s182 + $0x10] sm:$0xff] %v185
                %v187 = vld [vmem:[%s181 + $0xe0] sm:$0xff]
                %188 = vst [vmem:[%s182 + $0x20] sm:$0xff] %v187
                %v189 = vld [vmem:[%s181 + $0x150] sm:$0xff]
                %190 = vst [vmem:[%s182 + $0x30] sm:$0xff] %v189
                %s191 = sadd.s32 1, %s180
                %p192 = scmp.ge.s32.totalorder %s191, %s168
                %s193 = scalar_select %p192, 0, %s191
                %s194 = smul.u32 %s193, 16
                %s195 = smul.u32 %s193, 8
                %s196 = scalar_lea.vmem %s171, %s194
                %s197 = scalar_lea.vmem %s173, %s195 [#allocation2]
              $region44: #{tpu_custom_call.1} parent=31 // loop_footer
                %s177 = sadd.s32 %s175, 1
              $region45: #{tpu_custom_call.1} parent=31 // loop_footer_branch
                %174 = sbr.rel target = $region41
              $region46: #{tpu_custom_call.1} parent=31 // loop_exit
                _
            $region32: #{tpu_custom_call.1} parent=23 // pred_fallthru
              _
          $region24: #{tpu_custom_call.1} parent=19 // pred_fallthru
            _
          %266 = vnop
        $region20: #{tpu_custom_call.1} parent=15 // pred_fallthru
          _
      $region16: #{tpu_custom_call.1} parent=5 // pred_fallthru
        _
      %p267 = scmp.le.s32.totalorder 1, %s10
      %p268 = scmp.lt.s32.totalorder %s10, 9
      %p269 = pnand %p267, %p268
      %p270 = pneg %p269
      // Predicated region
      $region69: #{tpu_custom_call.1} parent=5 // pred_check
        _
      $region70: #{tpu_custom_call.1} parent=5 // pred_check_branch
        %272 = sbr.rel (%p269) target = $region72
      $region71: #{tpu_custom_call.1} parent=5 // pred_region
        %s273 = ssub.s32 %s10, 1
        %s274 = sand.u32 %s46, 1
        %s275 = sand.u32 %s46, 1
        %s276 = smul.addr %s275, 64
        %s277 = scalar_lea.vmem [#allocation2], %s276
        // Predicated region
        $region73: #{tpu_custom_call.1} parent=71 // pred_check
          %p278 = pneg %p59
        $region74: #{tpu_custom_call.1} parent=71 // pred_check_branch
          %280 = sbr.rel (%p278) target = $region76
        $region75: #{tpu_custom_call.1} parent=71 // pred_region
          _
        $region76: #{tpu_custom_call.1} parent=71 // pred_fallthru
          _
        %s281 = sand.u32 %s46, 1
        %s282 = sand.u32 %s46, 1
        %s283 = smul.addr %s282, 64
        %s284 = scalar_lea.vmem [#allocation2], %s283
        %p285 = pneg %p59
        %p286 = pneg %p56
        %p287 = pneg %p87
        %p288 = pneg %p84
        %s289 = sand.u32 %s74, 1
        %s290 = scalar_lea.sflag [#allocation4], %s289
        %s291 = sand.u32 %s74, 1
        %s292 = smul.addr %s291, 4
        %s293 = scalar_lea.vmem [#allocation3], %s292
        %s294 = smul.u32 4, %s20
        %s295 = smul.u32 2, %s22
        %s296 = ssub.s32 7, %s295
        %p297 = scmp.lt.s32.totalorder %s296, 2
        %s298 = scalar_select %p297, %s296, 2
        %s299 = smul.u32 512, %s298
        %p300 = scmp.eq.s32.totalorder %s22, 0
        // Predicated region
        $region77: #{tpu_custom_call.1} parent=71 // pred_check
          %p301 = pneg %p300
        $region78: #{tpu_custom_call.1} parent=71 // pred_check_branch
          %303 = sbr.rel (%p301) target = $region80
        $region79: #{tpu_custom_call.1} parent=71 // pred_region
          %304 = vst [vmem:[%s293] sm:$0xf] inf
        $region80: #{tpu_custom_call.1} parent=71 // pred_fallthru
          _
        %v305 = vld [vmem:[%s277] sm:$0xff]
        %v306 = vld [vmem:[%s277 + $0x8] sm:$0xff]
        %v307 = vld [vmem:[%s277 + $0x10] sm:$0xff]
        %v308 = vld [vmem:[%s277 + $0x18] sm:$0xff]
        %v309 = vld [vmem:[%s277 + $0x20] sm:$0xff]
        %v310 = vld [vmem:[%s277 + $0x28] sm:$0xff]
        %v311 = vld [vmem:[%s277 + $0x30] sm:$0xff]
        %v312 = vld [vmem:[%s277 + $0x38] sm:$0xff]
        %p313 = scmp.ne.s32.totalorder %s22, 3
        // Predicated region
        $region81: #{tpu_custom_call.1} parent=71 // pred_check
          %p314 = pneg %p313
        $region82: #{tpu_custom_call.1} parent=71 // pred_check_branch
          %316 = sbr.rel (%p314) target = $region84
        $region83: #{tpu_custom_call.1} parent=71 // pred_region
          %v317 = vld [vmem:[%s293] sm:$0xf]
          %v318 = vmin.f32 %v305, %v306
          %v319 = vrot.slane %v318, 4
          %v320 = vmin.f32 %v318, %v319
          %v321 = vrot.slane %v320, 2
          %v322 = vmin.f32 %v320, %v321
          %v323 = vrot.slane %v322, 1
          %v324 = vmin.f32 %v322, %v323
          %v325 = vmin.f32 %v307, %v308
          %v326 = vrot.slane %v325, 4
          %v327 = vmin.f32 %v325, %v326
          %v328 = vrot.slane %v327, 2
          %v329 = vmin.f32 %v327, %v328
          %v330 = vrot.slane %v329, 1
          %v331 = vmin.f32 %v329, %v330
          %v332 = vmin.f32 %v309, %v310
          %v333 = vrot.slane %v332, 4
          %v334 = vmin.f32 %v332, %v333
          %v335 = vrot.slane %v334, 2
          %v336 = vmin.f32 %v334, %v335
          %v337 = vrot.slane %v336, 1
          %v338 = vmin.f32 %v336, %v337
          %v339 = vmin.f32 %v311, %v312
          %v340 = vrot.slane %v339, 4
          %v341 = vmin.f32 %v339, %v340
          %v342 = vrot.slane %v341, 2
          %v343 = vmin.f32 %v341, %v342
          %v344 = vrot.slane %v343, 1
          %v345 = vmin.f32 %v343, %v344
          %vm350 = vcmask 1041409
          %v351 = vsel %vm350, %v331, %v324
          %vm352 = vcmask 1042434
          %v353 = vsel %vm352, %v338, %v351
          %vm354 = vcmask 1043459
          %v355 = vsel %vm354, %v345, %v353
          %v357 = vmin.f32 %v317, %v355
          %358 = vst [vmem:[%s293] sm:$0xf] %v357
        $region84: #{tpu_custom_call.1} parent=71 // pred_fallthru
          _
        %p359 = scmp.eq.s32.totalorder %s22, 3
        // Predicated region
        $region85: #{tpu_custom_call.1} parent=71 // pred_check
          %p360 = pneg %p359
        $region86: #{tpu_custom_call.1} parent=71 // pred_check_branch
          %362 = sbr.rel (%p360) target = $region88
        $region87: #{tpu_custom_call.1} parent=71 // pred_region
          %s363 = smul.u32 %s22, 16
          %s364 = ssub.s32 50, %s363
          %v365 = vlaneseq
          %v366 = vshrl.u32 %v365, 7
          %v367 = vadd.s32 %v366, 8
          %v368 = vstv %s364
          %vm369 = vcmp.lt.s32.totalorder %v366, %v368
          %vm370 = vcmp.lt.s32.totalorder %v367, %v368
          %v371 = vsel %vm369, %v305, inf
          %v372 = vsel %vm370, %v306, inf
          %v373 = vsel %vm369, %v307, inf
          %v374 = vsel %vm370, %v308, inf
          %v375 = vsel %vm369, %v309, inf
          %v376 = vsel %vm370, %v310, inf
          %v377 = vsel %vm369, %v311, inf
          %v378 = vsel %vm370, %v312, inf
          %v379 = vld [vmem:[%s293] sm:$0xf]
          %v380 = vmin.f32 %v371, %v372
          %v381 = vrot.slane %v380, 4
          %v382 = vmin.f32 %v380, %v381
          %v383 = vrot.slane %v382, 2
          %v384 = vmin.f32 %v382, %v383
          %v385 = vrot.slane %v384, 1
          %v386 = vmin.f32 %v384, %v385
          %v387 = vmin.f32 %v373, %v374
          %v388 = vrot.slane %v387, 4
          %v389 = vmin.f32 %v387, %v388
          %v390 = vrot.slane %v389, 2
          %v391 = vmin.f32 %v389, %v390
          %v392 = vrot.slane %v391, 1
          %v393 = vmin.f32 %v391, %v392
          %v394 = vmin.f32 %v375, %v376
          %v395 = vrot.slane %v394, 4
          %v396 = vmin.f32 %v394, %v395
          %v397 = vrot.slane %v396, 2
          %v398 = vmin.f32 %v396, %v397
          %v399 = vrot.slane %v398, 1
          %v400 = vmin.f32 %v398, %v399
          %v401 = vmin.f32 %v377, %v378
          %v402 = vrot.slane %v401, 4
          %v403 = vmin.f32 %v401, %v402
          %v404 = vrot.slane %v403, 2
          %v405 = vmin.f32 %v403, %v404
          %v406 = vrot.slane %v405, 1
          %v407 = vmin.f32 %v405, %v406
          %vm412 = vcmask 1041409
          %v413 = vsel %vm412, %v393, %v386
          %vm414 = vcmask 1042434
          %v415 = vsel %vm414, %v400, %v413
          %vm416 = vcmask 1043459
          %v417 = vsel %vm416, %v407, %v415
          %v419 = vmin.f32 %v379, %v417
          %420 = vst [vmem:[%s293] sm:$0xf] %v419
        $region88: #{tpu_custom_call.1} parent=71 // pred_fallthru
          _
        %s421 = sand.u32 %s74, 1
        %s422 = scalar_lea.sflag [#allocation4], %s421
        %s423 = sand.u32 %s74, 1
        %s424 = smul.addr %s423, 4
        %s425 = scalar_lea.vmem [#allocation3], %s424
        // Predicated region
        $region89: #{tpu_custom_call.1} parent=71 // pred_check
          %p426 = pneg %p84
        $region90: #{tpu_custom_call.1} parent=71 // pred_check_branch
          %428 = sbr.rel (%p426) target = $region92
        $region91: #{tpu_custom_call.1} parent=71 // pred_region
          %s430 = ssub.s32 64, 64
          %431 = vsyncadd %s422, %s430
          %s432 = smul.addr %s20, 2
          %s433 = sadd.s32 %s21, %s432
          %s434 = smul.addr %s433, 64
          %s435 = scalar_lea.hbm %s1, %s434
          %s437 = sshll.u32 %s425, 4
          %s438 = int_to_ptr.vmem [resolvable:$true] %s437
          %440 = dma.vmem_to_hbm [thread:$0]  %s438, 64, %s435, %s422
        $region92: #{tpu_custom_call.1} parent=71 // pred_fallthru
          _
      $region72: #{tpu_custom_call.1} parent=5 // pred_fallthru
        _
      %p441 = scmp.le.s32.totalorder 2, %s10
      // Predicated region
      $region93: #{tpu_custom_call.1} parent=5 // pred_check
        %p442 = pneg %p441
      $region94: #{tpu_custom_call.1} parent=5 // pred_check_branch
        %444 = sbr.rel (%p442) target = $region96
      $region95: #{tpu_custom_call.1} parent=5 // pred_region
        %s445 = ssub.s32 %s10, 2
        // Predicated region
        $region97: #{tpu_custom_call.1} parent=95 // pred_check
          %p446 = pneg %p90
        $region98: #{tpu_custom_call.1} parent=95 // pred_check_branch
          %448 = sbr.rel (%p446) target = $region100
        $region99: #{tpu_custom_call.1} parent=95 // pred_region
          %s449 = sand.u32 %s75, 1
          %s450 = scalar_lea.sflag [#allocation4], %s449
          %s451 = sand.u32 %s75, 1
          %s452 = smul.addr %s451, 4
          %s453 = scalar_lea.vmem [#allocation3], %s452
          %454 = dma.done %s450, 64
        $region100: #{tpu_custom_call.1} parent=95 // pred_fallthru
          _
      $region96: #{tpu_custom_call.1} parent=5 // pred_fallthru
        _
    $region6: #{tpu_custom_call.1} parent=1 // loop_footer
      %s14 = sadd.s32 1, %s10
    $region7: #{tpu_custom_call.1} parent=1 // loop_footer_branch
      %9 = sbr.rel target = $region3
    $region8: #{tpu_custom_call.1} parent=1 // loop_exit
      _
    %455 = vsyncpa [#allocation4], 1
    %s456 = scalar_lea.sflag [#allocation4], 1
    %457 = vsyncpa %s456, 1

</llo_original>
